<compile_context>
chip_gen: v7x
topology: tpu7x:2x2x1
jax: 0.10.0
libtpu: 0.0.40
codegen_flags: <defaults>
</compile_context>

<pallas_src>
import functools

import jax
import jax.numpy as jnp
from jax.experimental import pallas as pl
from jax.experimental.pallas import tpu as pltpu

EPSILON = float(jnp.finfo(jnp.float32).eps)  # == torch.finfo(torch.float32).eps


def _pick_feature_tile(features: int) -> int:
    """Largest 128-multiple tile that divides `features`, else the full axis."""
    for t in (2048, 1024, 512, 256, 128):
        if features % t == 0:
            return t
    return features  # block == full array dim is always legal


def _vmem_limit(block_bytes) -> int:
    """Explicit VMEM budget: double-buffered blocks, 2x headroom, >=16MiB, <=64MiB (v7x)."""
    need = 2 * sum(2 * int(b) for b in block_bytes) + (2 << 20)
    return int(max(min(need, 64 << 20), 16 << 20))


# ---------------------------------------------------------------------------
# Kernel A: per-layer numerators  num[i] = x @ W2[i].T  (h-independent, hence
# computed up front off the sequential carry path; layers are parallel and the
# features axis is an accumulated reduction).
# ---------------------------------------------------------------------------
def _numerator_kernel(x_ref, w2t_ref, num_ref):
    @pl.when(pl.program_id(1) == 0)
    def _():
        num_ref[...] = jnp.zeros_like(num_ref)

    # x tile: (B, tile_f); w2t tile: (tile_f, comp) -> accumulate (B, comp)
    num_ref[...] += jnp.dot(
        x_ref[...], w2t_ref[...], preferred_element_type=jnp.float32
    )[None]


def _compute_numerators(x, w2t):
    n_layers, features, comp = w2t.shape
    batch = x.shape[0]
    tile_f = _pick_feature_tile(features)
    n_ft = features // tile_f

    vmem = _vmem_limit(
        [batch * tile_f * 4, tile_f * comp * 4, batch * comp * 4]
    )
    return pl.pallas_call(
        _numerator_kernel,
        out_shape=jax.ShapeDtypeStruct((n_layers, batch, comp), jnp.float32),
        grid_spec=pltpu.PrefetchScalarGridSpec(
            num_scalar_prefetch=0,
            grid=(n_layers, n_ft),
            in_specs=[
                pl.BlockSpec((batch, tile_f), lambda i, f: (0, f)),               # x tile
                pl.BlockSpec((pl.Squeezed(), tile_f, comp), lambda i, f: (i, f, 0)),  # W2[i].T tile
            ],
            out_specs=pl.BlockSpec((1, batch, comp), lambda i, f: (i, 0, 0)),
        ),
        compiler_params=pltpu.CompilerParams(
            dimension_semantics=("parallel", "arbitrary"),
            vmem_limit_bytes=vmem,
        ),
    )(x, w2t)


# ---------------------------------------------------------------------------
# Kernel B: sequential multiplicative updates over layers (h carried in VMEM).
#   denominator = h @ (W1.T + l_2*I) + (l_1 + eps)
#   h          <- numerator * 1/denominator * h
# ---------------------------------------------------------------------------
def _update_kernel(h0_ref, num_ref, w1t_ref, out_ref, h_scratch, *, c):
    layer = pl.program_id(0)

    @pl.when(layer == 0)
    def _():
        h_scratch[...] = h0_ref[...]

    h = h_scratch[...]                                                   # (B, comp)
    denom = jnp.dot(h, w1t_ref[...], preferred_element_type=jnp.float32) + c
    h_scratch[...] = num_ref[...] * pl.reciprocal(denom, approx=False) * h

    @pl.when(layer == pl.num_programs(0) - 1)
    def _():
        out_ref[...] = h_scratch[...]


def unsuper_net(h, x, w1_stack, w2_stack, l_1=0.0, l_2=0.0):
    """Forward pass of UnsuperNet: n_layers multiplicative updates of h."""
    batch, comp = h.shape
    n_layers = w1_stack.shape[0]

    h = h.astype(jnp.float32)
    x = x.astype(jnp.float32)

    # One-time layout/algebra prep in XLA (outside the kernels):
    #   w1t[i] = W1[i].T + l_2*I   (folds the l_2*h regularizer into the matmul)
    #   w2t[i] = W2[i].T           (contraction-ready -> no in-kernel transpose)
    eye = jnp.eye(comp, dtype=jnp.float32)
    w1t = jnp.transpose(w1_stack, (0, 2, 1)).astype(jnp.float32) + float(l_2) * eye[None]
    w2t = jnp.transpose(w2_stack, (0, 2, 1)).astype(jnp.float32)
    c = float(l_1) + EPSILON

    # Hoisted, h-independent numerators for all layers (parallel over layers).
    num = _compute_numerators(x, w2t)

    kernel = functools.partial(_update_kernel, c=c)
    vmem = _vmem_limit([batch * comp * 4] * 4 + [comp * comp * 4])
    return pl.pallas_call(
        kernel,
        out_shape=jax.ShapeDtypeStruct((batch, comp), jnp.float32),
        grid_spec=pltpu.PrefetchScalarGridSpec(
            num_scalar_prefetch=0,
            grid=(n_layers,),
            in_specs=[
                pl.BlockSpec((batch, comp), lambda i: (0, 0)),                    # h0
                pl.BlockSpec((pl.Squeezed(), batch, comp), lambda i: (i, 0, 0)),  # num[i]
                pl.BlockSpec((pl.Squeezed(), comp, comp), lambda i: (i, 0, 0)),   # w1t[i]
            ],
            out_specs=pl.BlockSpec((batch, comp), lambda i: (0, 0)),
            scratch_shapes=[pltpu.VMEM((batch, comp), jnp.float32)],
        ),
        compiler_params=pltpu.CompilerParams(
            dimension_semantics=("arbitrary",),  # sequential carry over layers
            vmem_limit_bytes=vmem,
        ),
    )(h, num, w1t)


def unsuper_net_ref(h, x, w1_stack, w2_stack, l_1=0.0, l_2=0.0):
    """Pure-JAX reference mirroring the PyTorch forward exactly."""
    for i in range(w1_stack.shape[0]):
        denominator = h @ w1_stack[i].T + l_2 * h + l_1 + EPSILON
        numerator = x @ w2_stack[i].T
        h = (numerator / denominator) * h
    return h


if __name__ == "__main__":
    # Small, deterministic setup consistent with the module's forward:
    #   h: (batch, comp), x: (batch, features)
    n_layers, batch, comp, features = 3, 2, 8, 32
    l_1, l_2 = 0.1, 0.2

    key = jax.random.PRNGKey(0)
    k_h, k_x, k_w1, k_w2 = jax.random.split(key, 4)

    # Nonnegative data/latents (NMF convention) and deterministic weights
    # (uniform in [0, 1/sqrt(fan_in)) -> keeps denominators well-behaved).
    h0 = jnp.abs(jax.random.normal(k_h, (batch, comp), dtype=jnp.float32))
    x = jnp.abs(jax.random.normal(k_x, (batch, features), dtype=jnp.float32))
    w1 = jax.random.uniform(
        k_w1, (n_layers, comp, comp), dtype=jnp.float32,
        minval=0.0, maxval=1.0 / jnp.sqrt(comp))
    w2 = jax.random.uniform(
        k_w2, (n_layers, comp, features), dtype=jnp.float32,
        minval=0.0, maxval=1.0 / jnp.sqrt(features))

    out = unsuper_net(h0, x, w1, w2, l_1, l_2)
    out = jax.block_until_ready(out)

    ref = unsuper_net_ref(h0, x, w1, w2, l_1, l_2)
    assert out.shape == (batch, comp)
    assert jnp.allclose(out, ref, rtol=1e-5, atol=1e-5), (out, ref)

    print("KERNEL_OK")
</pallas_src>

<mosaic_0001>
module attributes {stable_mosaic.version = 11 : i64} {
  func.func @_numerator_kernel(%arg0: i32, %arg1: i32, %arg2: memref<2x32xf32, #tpu.memory_space<vmem>>, %arg3: memref<1x32x8xf32, #tpu.memory_space<vmem>>, %arg4: memref<1x2x8xf32, #tpu.memory_space<vmem>>) attributes {dimension_semantics = [#tpu.dimension_semantics<parallel>, #tpu.dimension_semantics<arbitrary>], iteration_bounds = array<i64: 3, 1>, scalar_prefetch = 0 : i64, scratch_operands = 0 : i64, tpu.core_type = #tpu.core_type<tc>, window_params = [{transform_indices = @transform_0, window_bounds = array<i64: 2, 32>}, {transform_indices = @transform_1, window_bounds = array<i64: 1, 32, 8>}, {transform_indices = @transform_2, window_bounds = array<i64: 1, 2, 8>}]} {
    %c0_i32 = arith.constant 0 : i32
    %0 = arith.cmpi eq, %arg1, %c0_i32 : i32
    %1 = arith.extui %0 : i1 to i32
    %c0_i32_0 = arith.constant 0 : i32
    %2 = arith.cmpi ne, %1, %c0_i32_0 : i32
    scf.if %2 {
      %cst_11 = arith.constant 0.000000e+00 : f32
      %11 = vector.broadcast %cst_11 : f32 to vector<1x2x8xf32>
      %c0_12 = arith.constant 0 : index
      %c0_13 = arith.constant 0 : index
      %c0_14 = arith.constant 0 : index
      %12 = vector.load %arg4[%c0_12, %c0_13, %c0_14] : memref<1x2x8xf32, #tpu.memory_space<vmem>>, vector<1x2x8xf32>
      tpu.vector_store %arg4[%c0_12, %c0_13, %c0_14], %11 {strides = array<i32>} : memref<1x2x8xf32, #tpu.memory_space<vmem>>, vector<1x2x8xf32>,
    } else {
    }
    %c0 = arith.constant 0 : index
    %c0_1 = arith.constant 0 : index
    %c0_2 = arith.constant 0 : index
    %3 = vector.load %arg4[%c0, %c0_1, %c0_2] : memref<1x2x8xf32, #tpu.memory_space<vmem>>, vector<1x2x8xf32>
    %c0_3 = arith.constant 0 : index
    %c0_4 = arith.constant 0 : index
    %4 = vector.load %arg2[%c0_3, %c0_4] : memref<2x32xf32, #tpu.memory_space<vmem>>, vector<2x32xf32>
    %c0_5 = arith.constant 0 : index
    %c0_6 = arith.constant 0 : index
    %c0_7 = arith.constant 0 : index
    %5 = vector.load %arg3[%c0_5, %c0_6, %c0_7] : memref<1x32x8xf32, #tpu.memory_space<vmem>>, vector<1x32x8xf32>
    %6 = vector.shape_cast %5 : vector<1x32x8xf32> to vector<32x8xf32>
    %cst = arith.constant dense<0.000000e+00> : vector<2x8xf32>
    %7 = tpu.matmul %4, %6, %cst {dimension_numbers = #tpu.dot_dimension_numbers<[1], [0], [0], [1], [0, 0, 1, 1], [], []>} : vector<2x32xf32>, vector<32x8xf32>, vector<2x8xf32> -> vector<2x8xf32>
    %8 = vector.shape_cast %7 : vector<2x8xf32> to vector<1x2x8xf32>
    %9 = arith.addf %3, %8 : vector<1x2x8xf32>
    %c0_8 = arith.constant 0 : index
    %c0_9 = arith.constant 0 : index
    %c0_10 = arith.constant 0 : index
    %10 = vector.load %arg4[%c0_8, %c0_9, %c0_10] : memref<1x2x8xf32, #tpu.memory_space<vmem>>, vector<1x2x8xf32>
    tpu.vector_store %arg4[%c0_8, %c0_9, %c0_10], %9 {strides = array<i32>} : memref<1x2x8xf32, #tpu.memory_space<vmem>>, vector<1x2x8xf32>,
    return
  }
  func.func @transform_0(%arg0: i32, %arg1: i32) -> (i32, i32) {
    %c0_i32 = arith.constant 0 : i32
    %c0_i32_0 = arith.constant 0 : i32
    return %c0_i32, %arg1 : i32, i32
  }
  func.func @transform_1(%arg0: i32, %arg1: i32) -> (i32, i32, i32) {
    %c0_i32 = arith.constant 0 : i32
    %c0_i32_0 = arith.constant 0 : i32
    return %arg0, %arg1, %c0_i32 : i32, i32, i32
  }
  func.func @transform_2(%arg0: i32, %arg1: i32) -> (i32, i32, i32) {
    %c0_i32 = arith.constant 0 : i32
    %c0_i32_0 = arith.constant 0 : i32
    %c0_i32_1 = arith.constant 0 : i32
    return %arg0, %c0_i32, %c0_i32_0 : i32, i32, i32
  }
}

</mosaic_0001>

<llo_original>
// kernel: tpu_custom_call.1
$region0: #{tpu_custom_call.1}
  #allocation0 [shape = 'u32[]', space=smem, size = 0x4, offset = 0x4, fixed_abs, tag = 'smem constant byte address 0x4 - core index']
  #allocation1 [shape = 'u32[144,128]{1,0:T(1,128)}', space=vmem, size = 0x12000, scoped, tag = 'internal scratch']
  %s0 = inlined_call_operand.vmem [shape: f32[2,32], index: 0, kind: input, shape index: {}]
  %s1 = inlined_call_operand.vmem [shape: f32[3,32,8], index: 1, kind: input, shape index: {}]
  %s2 = inlined_call_operand.hbm [shape: f32[3,2,8], index: 2, kind: output, shape index: {}]
  %s3 = sld [smem:[#allocation0]]
  $region45: #{tpu_custom_call.1} parent=0
    _
  %s5 = ssub.s32 1, %s3
  %s6 = scalar_select 0, %s5, %s3
  $region1: #{tpu_custom_call.1} parent=0
    #allocation2 [shape = 'u8[2048]{0}', space=vmem, size = 0x800, scoped, tag = 'output window, operand 0']
    #allocation3 [shape = 's32[2]{0}', space=sflag, size = 0x8, scoped, tag = 'scoped memory for tpu_custom_call.1']
    %7 = vsyncpa [#allocation3], 0
    %s8 = scalar_lea.sflag [#allocation3], 1
    %9 = vsyncpa %s8, 0
    loop: start=0, step=1, limit=5
    $region2: #{tpu_custom_call.1} parent=1 // loop_pre_header
      _
    $region3: #{tpu_custom_call.1} parent=1 // loop_header
      %s11 = sphi 0, %s15
      %p12 = scmp.ge.s32.totalorder %s11, 5
      %s18 = sphi 0, %s30
      %s19 = sphi 0, %s26
      %s20 = sphi 0, %s18
      %s21 = sphi 0, %s19
      %s22 = sphi 0, %s20
      %s23 = sphi 0, %s21
      %s33 = sphi 0, %s35
      %s36 = sphi 0, %s33
      %s37 = sphi 0, %s36
      %s53 = sphi 0, %s37
      %s61 = sphi 0, %s63
      %s64 = sphi 0, %s61
      %s65 = sphi 0, %s64
      %s81 = sphi 0, %s65
      %s87 = sphi 0, %s89
      %s90 = sphi 0, %s87
      %s91 = sphi 0, %s90
      %s107 = sphi 0, %s91
    $region4: #{tpu_custom_call.1} parent=1 // loop_header_branch
      %14 = sbr.rel (%p12) target = $region8
    $region5: #{tpu_custom_call.1} parent=1 // loop_body
      %s16 = ssub.s32 %s11, 1
      %s17 = ssub.s32 %s11, 2
      %s24 = sadd.s32 1, %s19
      %p25 = scmp.ge.s32.totalorder %s24, 1
      %s26 = scalar_select %p25, 0, %s24
      %s27 = sadd.s32 1, %s18
      %s28 = scalar_select %p25, %s27, %s18
      %p29 = scmp.ge.s32.totalorder %s28, 3
      %s30 = scalar_select %p29, 0, %s28
      %s31 = ssub.s32 %s19, %s26
      %p32 = scmp.eq.s32.totalorder %s31, 0
      %s34 = sadd.s32 %s33, 1
      %s35 = scalar_select %p32, %s33, %s34
      %p38 = pneg %p32
      %p39 = scmp.eq.s32.totalorder %s11, 2
      %p40 = por %p38, %p39
      %p41 = scmp.ne.s32.totalorder %s33, %s36
      %p42 = scmp.eq.s32.totalorder %s11, 0
      %p43 = por %p41, %p42
      %p44 = scmp.ne.s32.totalorder %s33, %s36
      %p45 = scmp.eq.s32.totalorder %s16, 2
      %p46 = por %p44, %p45
      %p47 = scmp.ne.s32.totalorder %s36, %s37
      %p48 = scmp.eq.s32.totalorder %s16, 0
      %p49 = por %p47, %p48
      %p50 = scmp.ne.s32.totalorder %s36, %s37
      %p51 = scmp.eq.s32.totalorder %s17, 2
      %p52 = por %p50, %p51
      %p54 = scmp.ne.s32.totalorder %s37, %s53
      %p55 = scmp.eq.s32.totalorder %s17, 0
      %p56 = por %p54, %p55
      %s57 = ssub.s32 %s18, %s30
      %s58 = ssub.s32 %s19, %s26
      %s59 = sor.u32 %s57, %s58
      %p60 = scmp.eq.s32.totalorder %s59, 0
      %s62 = sadd.s32 %s61, 1
      %s63 = scalar_select %p60, %s61, %s62
      %p66 = pneg %p60
      %p67 = scmp.eq.s32.totalorder %s11, 2
      %p68 = por %p66, %p67
      %p69 = scmp.ne.s32.totalorder %s61, %s64
      %p70 = scmp.eq.s32.totalorder %s11, 0
      %p71 = por %p69, %p70
      %p72 = scmp.ne.s32.totalorder %s61, %s64
      %p73 = scmp.eq.s32.totalorder %s16, 2
      %p74 = por %p72, %p73
      %p75 = scmp.ne.s32.totalorder %s64, %s65
      %p76 = scmp.eq.s32.totalorder %s16, 0
      %p77 = por %p75, %p76
      %p78 = scmp.ne.s32.totalorder %s64, %s65
      %p79 = scmp.eq.s32.totalorder %s17, 2
      %p80 = por %p78, %p79
      %p82 = scmp.ne.s32.totalorder %s65, %s81
      %p83 = scmp.eq.s32.totalorder %s17, 0
      %p84 = por %p82, %p83
      %s85 = ssub.s32 %s18, %s30
      %p86 = scmp.eq.s32.totalorder %s85, 0
      %s88 = sadd.s32 %s87, 1
      %s89 = scalar_select %p86, %s87, %s88
      %p92 = pneg %p86
      %p93 = scmp.eq.s32.totalorder %s11, 2
      %p94 = por %p92, %p93
      %p95 = scmp.ne.s32.totalorder %s87, %s90
      %p96 = scmp.eq.s32.totalorder %s11, 0
      %p97 = por %p95, %p96
      %p98 = scmp.ne.s32.totalorder %s87, %s90
      %p99 = scmp.eq.s32.totalorder %s16, 2
      %p100 = por %p98, %p99
      %p101 = scmp.ne.s32.totalorder %s90, %s91
      %p102 = scmp.eq.s32.totalorder %s16, 0
      %p103 = por %p101, %p102
      %p104 = scmp.ne.s32.totalorder %s90, %s91
      %p105 = scmp.eq.s32.totalorder %s17, 2
      %p106 = por %p104, %p105
      %p108 = scmp.ne.s32.totalorder %s91, %s107
      %p109 = scmp.eq.s32.totalorder %s17, 0
      %p110 = por %p108, %p109
      %p111 = scmp.le.s32.totalorder 1, %s11
      %p112 = scmp.lt.s32.totalorder %s11, 4
      %p113 = pnand %p111, %p112
      %p114 = pneg %p113
      // Predicated region
      $region9: #{tpu_custom_call.1} parent=5 // pred_check
        _
      $region10: #{tpu_custom_call.1} parent=5 // pred_check_branch
        %116 = sbr.rel (%p113) target = $region12
      $region11: #{tpu_custom_call.1} parent=5 // pred_region
        %s117 = ssub.s32 %s11, 1
        // Predicated region
        $region13: #{tpu_custom_call.1} parent=11 // pred_check
          %p118 = pneg %p49
        $region14: #{tpu_custom_call.1} parent=11 // pred_check_branch
          %120 = sbr.rel (%p118) target = $region16
        $region15: #{tpu_custom_call.1} parent=11 // pred_region
          %p121 = scmp.lt.s32.totalorder %s21, 0
          %s122 = scalar_select %p121, %s21, 0
          %s123 = smul.addr %s122, 2
          %s124 = scalar_lea.vmem %s0, %s123
        $region16: #{tpu_custom_call.1} parent=11 // pred_fallthru
          _
      $region12: #{tpu_custom_call.1} parent=5 // pred_fallthru
        _
      %p125 = scmp.lt.s32.totalorder %s11, 3
      // Predicated region
      $region17: #{tpu_custom_call.1} parent=5 // pred_check
        %p126 = pneg %p125
      $region18: #{tpu_custom_call.1} parent=5 // pred_check_branch
        %128 = sbr.rel (%p126) target = $region20
      $region19: #{tpu_custom_call.1} parent=5 // pred_region
        // Predicated region
        $region21: #{tpu_custom_call.1} parent=19 // pred_check
          %p129 = pneg %p71
        $region22: #{tpu_custom_call.1} parent=19 // pred_check_branch
          %131 = sbr.rel (%p129) target = $region24
        $region23: #{tpu_custom_call.1} parent=19 // pred_region
          %s132 = smul.u32 4, %s19
          %p133 = scmp.lt.s32.totalorder %s18, 2
          %s134 = scalar_select %p133, %s18, 2
          %p135 = scmp.lt.s32.totalorder %s132, 3
          %s136 = scalar_select %p135, %s132, 3
          %s137 = smul.addr %s134, 4
          %s138 = sadd.s32 %s136, %s137
          %s139 = smul.addr %s138, 8
          %s140 = scalar_lea.vmem %s1, %s139
          %s141 = smul.u32 4, %s19
        $region24: #{tpu_custom_call.1} parent=19 // pred_fallthru
          _
      $region20: #{tpu_custom_call.1} parent=5 // pred_fallthru
        _
      %p142 = scmp.le.s32.totalorder 1, %s11
      %p143 = scmp.lt.s32.totalorder %s11, 4
      %p144 = pnand %p142, %p143
      %p145 = pneg %p144
      // Predicated region
      $region25: #{tpu_custom_call.1} parent=5 // pred_check
        _
      $region26: #{tpu_custom_call.1} parent=5 // pred_check_branch
        %147 = sbr.rel (%p144) target = $region28
      $region27: #{tpu_custom_call.1} parent=5 // pred_region
        %s148 = ssub.s32 %s11, 1
        %p149 = scmp.lt.s32.totalorder %s21, 0
        %s150 = scalar_select %p149, %s21, 0
        %s151 = smul.addr %s150, 2
        %s152 = scalar_lea.vmem %s0, %s151
        %p153 = pneg %p49
        %p154 = pneg %p46
        %s155 = smul.u32 4, %s21
        %p156 = scmp.lt.s32.totalorder %s20, 2
        %s157 = scalar_select %p156, %s20, 2
        %p158 = scmp.lt.s32.totalorder %s155, 3
        %s159 = scalar_select %p158, %s155, 3
        %s160 = smul.addr %s157, 4
        %s161 = sadd.s32 %s159, %s160
        %s162 = smul.addr %s161, 8
        %s163 = scalar_lea.vmem %s1, %s162
        %p164 = pneg %p77
        %p165 = pneg %p74
        %p166 = pneg %p103
        %p167 = pneg %p100
        %s168 = sand.u32 %s90, 1
        %s169 = scalar_lea.sflag [#allocation3], %s168
        %s170 = sand.u32 %s90, 1
        %s171 = smul.addr %s170, 2
        %s172 = scalar_lea.vmem [#allocation2], %s171
        %p173 = scmp.lt.s32.totalorder %s21, 0
        %s174 = scalar_select %p173, %s21, 0
        %s175 = smul.addr %s174, 2
        %s176 = scalar_lea.vmem %s0, %s175
        %s177 = smul.u32 4, %s21
        %p178 = scmp.lt.s32.totalorder %s20, 2
        %s179 = scalar_select %p178, %s20, 2
        %p180 = scmp.lt.s32.totalorder %s177, 3
        %s181 = scalar_select %p180, %s177, 3
        %s182 = smul.addr %s179, 4
        %s183 = sadd.s32 %s181, %s182
        %s184 = smul.addr %s183, 8
        %s185 = scalar_lea.vmem %s1, %s184
        %s186 = smul.u32 4, %s21
        %p187 = scmp.eq.s32.totalorder %s21, 0
        // Predicated region
        $region29: #{tpu_custom_call.1} parent=27 // pred_check
          %p188 = pneg %p187
        $region30: #{tpu_custom_call.1} parent=27 // pred_check_branch
          %190 = sbr.rel (%p188) target = $region32
        $region31: #{tpu_custom_call.1} parent=27 // pred_region
          %vm191 = vcmask 58368
          %192 = vst.msk [vmem:[%s172] sm:$0x3] %vm191, 0.0
        $region32: #{tpu_custom_call.1} parent=27 // pred_fallthru
          _
        %v193 = vld [vmem:[%s172] sm:$0x3]
        %v194 = vld [vmem:[%s176] sm:$0x3]
        %v195 = vld [vmem:[%s185] sm:$0xff]
        %v196 = vld [vmem:[%s185 + $0x8] sm:$0xff]
        %v197 = vld [vmem:[%s185 + $0x10] sm:$0xff]
        %v198 = vld [vmem:[%s185 + $0x18] sm:$0xff]
        %vm199 = vcmask 261120
        %v201 = vsel %vm199, %v194, 0
        %203 = vmatprep.subr.mxu0 0.0
        %204 = vmatpush1.msra.mxu0 %v195
        %205 = vmatprep.subr.mxu0 0.0
        %206 = vmatpush1.msra.mxu0 %v196
        %207 = vmatprep.subr.mxu0 0.0
        %208 = vmatpush1.msra.mxu0 %v197
        %209 = vmatprep.subr.mxu0 0.0
        %210 = vmatpush1.msra.mxu0 %v198
        %211 = vmatprep.subr.mxu0 0.0
        %212 = vmatpush1.msra.mxu0 0.0
        %213 = vmatprep.subr.mxu0 0.0
        %214 = vmatpush1.msra.mxu0 0.0
        %215 = vmatprep.subr.mxu0 0.0
        %216 = vmatpush1.msra.mxu0 0.0
        %217 = vmatprep.subr.mxu0 0.0
        %218 = vmatpush1.msra.mxu0 0.0
        %219 = vmatprep.subr.mxu0 0.0
        %220 = vmatpush1.msra.mxu0 0.0
        %221 = vmatprep.subr.mxu0 0.0
        %222 = vmatpush1.msra.mxu0 0.0
        %223 = vmatprep.subr.mxu0 0.0
        %224 = vmatpush1.msra.mxu0 0.0
        %225 = vmatprep.subr.mxu0 0.0
        %226 = vmatpush1.msra.mxu0 0.0
        %227 = vmatprep.subr.mxu0 0.0
        %228 = vmatpush1.msra.mxu0 0.0
        %229 = vmatprep.subr.mxu0 0.0
        %230 = vmatpush1.msra.mxu0 0.0
        %231 = vmatprep.subr.mxu0 0.0
        %232 = vmatpush1.msra.mxu0 0.0
        %233 = vmatprep.subr.mxu0 0.0
        %234 = vmatpush1.msra.mxu0 0.0
        %235 = vmatprep.subr.mxu0 0.0
        %236 = vmatpush1.msra.mxu0 0.0
        %237 = vmatprep.subr.mxu0 0.0
        %238 = vmatpush1.msra.mxu0 0.0
        %239 = vmatprep.subr.mxu0 0.0
        %240 = vmatpush1.msra.mxu0 0.0
        %241 = vmatprep.subr.mxu0 0.0
        %242 = vmatpush1.msra.mxu0 0.0
        %243 = vmatprep.subr.mxu0 0.0
        %244 = vmatpush1.msra.mxu0 0.0
        %245 = vmatprep.subr.mxu0 0.0
        %246 = vmatpush1.msra.mxu0 0.0
        %247 = vmatprep.subr.mxu0 0.0
        %248 = vmatpush1.msra.mxu0 0.0
        %249 = vmatprep.subr.mxu0 0.0
        %250 = vmatpush1.msra.mxu0 0.0
        %251 = vmatprep.subr.mxu0 0.0
        %252 = vmatpush1.msra.mxu0 0.0
        %253 = vmatprep.subr.mxu0 0.0
        %254 = vmatpush1.msra.mxu0 0.0
        %255 = vmatprep.subr.mxu0 0.0
        %256 = vmatpush1.msra.mxu0 0.0
        %257 = vmatprep.subr.mxu0 0.0
        %258 = vmatpush1.msra.mxu0 0.0
        %259 = vmatprep.subr.mxu0 0.0
        %260 = vmatpush1.msra.mxu0 0.0
        %261 = vmatprep.subr.mxu0 0.0
        %262 = vmatpush1.msra.mxu0 0.0
        %263 = vmatprep.subr.mxu0 0.0
        %264 = vmatpush1.msra.mxu0 0.0
        %265 = vmatprep.subr.mxu0 0.0
        %266 = vmatpush1.msra.mxu0 0.0
        %267 = vmatprep.mubr.f32.mxu0 0.0
        %268 = vmatmul.mubr.f32.gmra.mrb[0].mxu0 %v201
        %v269 = vpop.f32.mrb[0].mxu0
        %v270 = vadd.f32 0.0, %v269
        %v271 = vpop.f32.mrb[0].mxu0
        %272 = vdwg.mxu0
        %v273 = vadd.f32 %v193, %v270
        %vm274 = vcmask 58368
        %275 = vst.msk [vmem:[%s172] sm:$0x3] %vm274, %v273
        %s276 = sand.u32 %s90, 1
        %s277 = scalar_lea.sflag [#allocation3], %s276
        %s278 = sand.u32 %s90, 1
        %s279 = smul.addr %s278, 2
        %s280 = scalar_lea.vmem [#allocation2], %s279
        // Predicated region
        $region33: #{tpu_custom_call.1} parent=27 // pred_check
          %p281 = pneg %p100
        $region34: #{tpu_custom_call.1} parent=27 // pred_check_branch
          %283 = sbr.rel (%p281) target = $region36
        $region35: #{tpu_custom_call.1} parent=27 // pred_region
          %s285 = ssub.s32 32, 32
          %286 = vsyncadd %s277, %s285
          %s287 = smul.addr %s20, 32
          %s288 = scalar_lea.hbm %s2, %s287
          %s290 = sshll.u32 %s280, 4
          %s291 = int_to_ptr.vmem [resolvable:$true] %s290
          %293 = dma.vmem_to_hbm [thread:$0]  %s291, 32, %s288, %s277
        $region36: #{tpu_custom_call.1} parent=27 // pred_fallthru
          _
      $region28: #{tpu_custom_call.1} parent=5 // pred_fallthru
        _
      %p294 = scmp.le.s32.totalorder 2, %s11
      // Predicated region
      $region37: #{tpu_custom_call.1} parent=5 // pred_check
        %p295 = pneg %p294
      $region38: #{tpu_custom_call.1} parent=5 // pred_check_branch
        %297 = sbr.rel (%p295) target = $region40
      $region39: #{tpu_custom_call.1} parent=5 // pred_region
        %s298 = ssub.s32 %s11, 2
        // Predicated region
        $region41: #{tpu_custom_call.1} parent=39 // pred_check
          %p299 = pneg %p106
        $region42: #{tpu_custom_call.1} parent=39 // pred_check_branch
          %301 = sbr.rel (%p299) target = $region44
        $region43: #{tpu_custom_call.1} parent=39 // pred_region
          %s302 = sand.u32 %s91, 1
          %s303 = scalar_lea.sflag [#allocation3], %s302
          %s304 = sand.u32 %s91, 1
          %s305 = smul.addr %s304, 2
          %s306 = scalar_lea.vmem [#allocation2], %s305
          %307 = dma.done %s303, 32
        $region44: #{tpu_custom_call.1} parent=39 // pred_fallthru
          _
      $region40: #{tpu_custom_call.1} parent=5 // pred_fallthru
        _
    $region6: #{tpu_custom_call.1} parent=1 // loop_footer
      %s15 = sadd.s32 1, %s11
    $region7: #{tpu_custom_call.1} parent=1 // loop_footer_branch
      %10 = sbr.rel target = $region3
    $region8: #{tpu_custom_call.1} parent=1 // loop_exit
      _
    %308 = vsyncpa [#allocation3], 1
    %s309 = scalar_lea.sflag [#allocation3], 1
    %310 = vsyncpa %s309, 1

</llo_original>
